<compile_context>
chip_gen: v7x
topology: tpu7x:2x2x1
jax: 0.10.0
libtpu: 0.0.40
codegen_flags: <defaults>
</compile_context>

<pallas_src>
import jax
import jax.numpy as jnp
from jax.experimental import pallas as pl
from jax.experimental.pallas import tpu as pltpu

INPUT_SIZE = 5
HIDDEN_SIZE = 16


def _round_up(n: int, m: int) -> int:
    return ((n + m - 1) // m) * m


def _make_kernel(in_dim: int, hid: int):
    """Kernel over one batch tile; batch lives on the lane axis."""

    def kernel(x_ref, wp1_ref, wp2_ref, o_ref):
        # x_ref  : (in_dim, TB)   input tile (batch on lanes), f32 or bf16
        # wp1_ref: (hid, in_dim+1) packed [W1^T | b1], f32, VMEM-resident
        # wp2_ref: (1, hid+1)      packed [w2^T | b2], f32, VMEM-resident
        # o_ref  : (1, TB)         lane-dense output tile
        x = x_ref[...]                                  # no upcast: MXU takes bf16/f32
        w1t = wp1_ref[:, 0:in_dim]                      # (hid, in_dim)
        b1 = wp1_ref[:, in_dim:in_dim + 1]              # (hid, 1)
        w2t = wp2_ref[:, 0:hid]                         # (1, hid)
        b2 = wp2_ref[:, hid:hid + 1]                    # (1, 1)

        # Layer 1 on the MXU: (hid, in) @ (in, TB) -> (hid, TB), f32 accumulate.
        h = jnp.dot(w1t.astype(x.dtype), x, preferred_element_type=jnp.float32) + b1
        h = jnp.maximum(h, 0.0)                         # ReLU (VPU)

        # Layer 2 on the MXU: (1, hid) @ (hid, TB) -> (1, TB).
        z = jnp.dot(w2t, h, preferred_element_type=jnp.float32) + b2

        # Sigmoid via tanh so the transcendental goes to the EUP (VPU stays free).
        o_ref[...] = (0.5 * (jnp.tanh(0.5 * z) + 1.0)).astype(o_ref.dtype)

    return kernel


def _pack_params(w1, b1, w2, b2):
    hid = w1.shape[1]
    wp1 = jnp.concatenate(
        [w1.T.astype(jnp.float32), jnp.reshape(b1, (hid, 1)).astype(jnp.float32)],
        axis=1,
    )                                                   # (hid, in_dim + 1)
    wp2 = jnp.concatenate(
        [jnp.reshape(w2, (1, hid)).astype(jnp.float32),
         jnp.reshape(b2, (1, 1)).astype(jnp.float32)],
        axis=1,
    )                                                   # (1, hid + 1)
    return wp1, wp2


def fusion_net_t(x_t, w1, b1, w2, b2, *, block_b: int = 131072):
    """Preferred entry point.

    x_t: (in_dim, B) — batch already on the lane axis (producer emits / keeps the
    transposed copy, so no HBM transpose pass is needed).  Returns (B, 1) f32.
    """
    in_dim, B = x_t.shape
    hid = w1.shape[1]
    wp1, wp2 = _pack_params(w1, b1, w2, b2)

    if B <= 128:
        tb = B                      # full-extent lane block (legal: equals array dim)
    else:
        # Large lane-dense tiles amortize the ~0.35us per-grid-step overhead;
        # cap near ceil(B/4) (rounded to 128) so the "parallel" grid keeps >=4
        # steps for v7x's two TensorCores, and at block_b so the double-buffered
        # VMEM footprint stays within the raised limit.
        tb = min(block_b, _round_up(-(-B // 4), 128))
        tb = max(tb, 128)

    grid = (pl.cdiv(B, tb),)        # partial last block handled by Pallas clipping

    out = pl.pallas_call(
        _make_kernel(in_dim, hid),
        out_shape=jax.ShapeDtypeStruct((1, B), jnp.float32),
        grid=grid,
        in_specs=[
            pl.BlockSpec((in_dim, tb), lambda i: (0, i)),          # streamed batch tiles
            pl.BlockSpec((hid, in_dim + 1), lambda i: (0, 0)),     # resident [W1^T | b1]
            pl.BlockSpec((1, hid + 1), lambda i: (0, 0)),          # resident [w2^T | b2]
        ],
        out_specs=pl.BlockSpec((1, tb), lambda i: (0, i)),         # lane-dense output
        compiler_params=pltpu.CompilerParams(
            dimension_semantics=("parallel",),                     # v7x: use both TCs
            vmem_limit_bytes=48 * 1024 * 1024,                     # fits v5e/v6e/v7x
        ),
    )(x_t, wp1, wp2)

    return out.reshape(B, 1)        # metadata-only reshape, no extra copy


def fusion_net(x, w1, b1, w2, b2, *, block_b: int = 131072):
    """Module-native wrapper taking x: (B, in_dim).

    NOTE: materializes x.T in HBM (one extra read+write pass over x).  Producers
    that can emit x in (in_dim, B) layout should call fusion_net_t directly.
    """
    return fusion_net_t(jnp.transpose(x), w1, b1, w2, b2, block_b=block_b)


def fusion_reference(x, w1, b1, w2, b2):
    """Plain-JAX reference (also the preferred path for genuinely tiny batches)."""
    h = jnp.maximum(x.astype(jnp.float32) @ w1 + jnp.reshape(b1, (1, -1)), 0.0)
    return jax.nn.sigmoid(h @ jnp.reshape(w2, (-1, 1)) + jnp.reshape(b2, (1, 1)))


def init_params(key, input_size=INPUT_SIZE, hidden_size=HIDDEN_SIZE):
    # Deterministic init mimicking torch.nn.Linear default (uniform +/- 1/sqrt(fan_in)).
    k1, k2, k3, k4 = jax.random.split(key, 4)
    bound1 = 1.0 / jnp.sqrt(input_size)
    bound2 = 1.0 / jnp.sqrt(hidden_size)
    w1 = jax.random.uniform(k1, (input_size, hidden_size), jnp.float32, -bound1, bound1)
    b1 = jax.random.uniform(k2, (1, hidden_size), jnp.float32, -bound1, bound1)
    w2 = jax.random.uniform(k3, (hidden_size, 1), jnp.float32, -bound2, bound2)
    b2 = jax.random.uniform(k4, (1, 1), jnp.float32, -bound2, bound2)
    return w1, b1, w2, b2


if __name__ == "__main__":
    key = jax.random.PRNGKey(0)
    kx1, kx2, kp = jax.random.split(key, 3)
    w1, b1, w2, b2 = init_params(kp)

    # 1) Small case consistent with the module: batch=8, input_size=5 (f32).
    x = jax.random.normal(kx1, (8, INPUT_SIZE), jnp.float32)
    out = jax.block_until_ready(fusion_net(x, w1, b1, w2, b2))
    ref = fusion_reference(x, w1, b1, w2, b2)
    assert out.shape == (8, 1)
    assert jnp.allclose(out, ref, atol=2e-5, rtol=1e-4)

    # 2) Multi-tile grid with a partial last block (B=1000 -> tb=256, 4 steps),
    #    via the preferred producer-transposed entry point (no pad, no transpose).
    x2 = jax.random.normal(kx2, (1000, INPUT_SIZE), jnp.float32)
    out2 = jax.block_until_ready(fusion_net_t(x2.T, w1, b1, w2, b2))
    ref2 = fusion_reference(x2, w1, b1, w2, b2)
    assert out2.shape == (1000, 1)
    assert jnp.allclose(out2, ref2, atol=2e-5, rtol=1e-4)

    # 3) bf16-transport path: bf16 x feeds the MXU directly (f32 accumulation);
    #    reference uses the same bf16-rounded weights for an apples-to-apples check.
    x3 = x2.astype(jnp.bfloat16)
    out3 = jax.block_until_ready(fusion_net(x3, w1, b1, w2, b2, block_b=128))
    w1q = w1.astype(jnp.bfloat16).astype(jnp.float32)
    ref3 = fusion_reference(x3.astype(jnp.float32), w1q, b1, w2, b2)
    assert jnp.allclose(out3, ref3, atol=5e-4, rtol=5e-4)

    print("KERNEL_OK")
</pallas_src>

<mosaic_0001>
module attributes {stable_mosaic.version = 11 : i64} {
  func.func @kernel(%arg0: i32, %arg1: memref<5x8xf32, #tpu.memory_space<vmem>>, %arg2: memref<16x6xf32, #tpu.memory_space<vmem>>, %arg3: memref<1x17xf32, #tpu.memory_space<vmem>>, %arg4: memref<1x8xf32, #tpu.memory_space<vmem>>) attributes {dimension_semantics = [#tpu.dimension_semantics<parallel>], iteration_bounds = array<i64: 1>, scalar_prefetch = 0 : i64, scratch_operands = 0 : i64, tpu.core_type = #tpu.core_type<tc>, window_params = [{transform_indices = @transform_0, window_bounds = array<i64: 5, 8>}, {pipeline_mode = #tpu.pipeline_mode<synchronous>, transform_indices = @transform_1, window_bounds = array<i64: 16, 6>}, {pipeline_mode = #tpu.pipeline_mode<synchronous>, transform_indices = @transform_2, window_bounds = array<i64: 1, 17>}, {transform_indices = @transform_3, window_bounds = array<i64: 1, 8>}]} {
    %c0 = arith.constant 0 : index
    %c0_0 = arith.constant 0 : index
    %0 = vector.load %arg1[%c0, %c0_0] : memref<5x8xf32, #tpu.memory_space<vmem>>, vector<5x8xf32>
    %c0_1 = arith.constant 0 : index
    %c0_2 = arith.constant 0 : index
    %1 = vector.load %arg2[%c0_1, %c0_2] : memref<16x6xf32, #tpu.memory_space<vmem>>, vector<16x5xf32>
    %c0_3 = arith.constant 0 : index
    %c5 = arith.constant 5 : index
    %2 = vector.load %arg2[%c0_3, %c5] : memref<16x6xf32, #tpu.memory_space<vmem>>, vector<16x1xf32>
    %c0_4 = arith.constant 0 : index
    %c0_5 = arith.constant 0 : index
    %3 = vector.load %arg3[%c0_4, %c0_5] : memref<1x17xf32, #tpu.memory_space<vmem>>, vector<1x16xf32>
    %c0_6 = arith.constant 0 : index
    %c16 = arith.constant 16 : index
    %4 = vector.load %arg3[%c0_6, %c16] : memref<1x17xf32, #tpu.memory_space<vmem>>, vector<1x1xf32>
    %cst = arith.constant dense<0.000000e+00> : vector<16x8xf32>
    %5 = tpu.matmul %1, %0, %cst {dimension_numbers = #tpu.dot_dimension_numbers<[1], [0], [0], [1], [0, 0, 1, 1], [], []>} : vector<16x5xf32>, vector<5x8xf32>, vector<16x8xf32> -> vector<16x8xf32>
    %6 = vector.broadcast %2 : vector<16x1xf32> to vector<16x8xf32>
    %7 = arith.addf %5, %6 : vector<16x8xf32>
    %cst_7 = arith.constant 0.000000e+00 : f32
    %8 = vector.broadcast %cst_7 : f32 to vector<16x8xf32>
    %9 = arith.maximumf %7, %8 : vector<16x8xf32>
    %cst_8 = arith.constant dense<0.000000e+00> : vector<1x8xf32>
    %10 = tpu.matmul %3, %9, %cst_8 {dimension_numbers = #tpu.dot_dimension_numbers<[1], [0], [0], [1], [0, 0, 1, 1], [], []>} : vector<1x16xf32>, vector<16x8xf32>, vector<1x8xf32> -> vector<1x8xf32>
    %11 = vector.broadcast %4 : vector<1x1xf32> to vector<1x8xf32>
    %12 = arith.addf %10, %11 : vector<1x8xf32>
    %cst_9 = arith.constant 5.000000e-01 : f32
    %13 = vector.broadcast %cst_9 : f32 to vector<1x8xf32>
    %14 = arith.mulf %13, %12 : vector<1x8xf32>
    %15 = math.tanh %14 : vector<1x8xf32>
    %cst_10 = arith.constant 1.000000e+00 : f32
    %16 = vector.broadcast %cst_10 : f32 to vector<1x8xf32>
    %17 = arith.addf %15, %16 : vector<1x8xf32>
    %cst_11 = arith.constant 5.000000e-01 : f32
    %18 = vector.broadcast %cst_11 : f32 to vector<1x8xf32>
    %19 = arith.mulf %18, %17 : vector<1x8xf32>
    %c0_12 = arith.constant 0 : index
    %c0_13 = arith.constant 0 : index
    %20 = vector.load %arg4[%c0_12, %c0_13] : memref<1x8xf32, #tpu.memory_space<vmem>>, vector<1x8xf32>
    tpu.vector_store %arg4[%c0_12, %c0_13], %19 {strides = array<i32>} : memref<1x8xf32, #tpu.memory_space<vmem>>, vector<1x8xf32>,
    return
  }
  func.func @transform_0(%arg0: i32) -> (i32, i32) {
    %c0_i32 = arith.constant 0 : i32
    %c0_i32_0 = arith.constant 0 : i32
    return %c0_i32, %arg0 : i32, i32
  }
  func.func @transform_1(%arg0: i32) -> (i32, i32) {
    %c0_i32 = arith.constant 0 : i32
    %c0_i32_0 = arith.constant 0 : i32
    %c0_i32_1 = arith.constant 0 : i32
    return %c0_i32, %c0_i32_0 : i32, i32
  }
  func.func @transform_2(%arg0: i32) -> (i32, i32) {
    %c0_i32 = arith.constant 0 : i32
    %c0_i32_0 = arith.constant 0 : i32
    %c0_i32_1 = arith.constant 0 : i32
    return %c0_i32, %c0_i32_0 : i32, i32
  }
  func.func @transform_3(%arg0: i32) -> (i32, i32) {
    %c0_i32 = arith.constant 0 : i32
    %c0_i32_0 = arith.constant 0 : i32
    return %c0_i32, %arg0 : i32, i32
  }
}

</mosaic_0001>

<llo_original>
// kernel: tpu_custom_call.1
$region0: #{tpu_custom_call.1}
  #allocation0 [shape = 'u32[]', space=smem, size = 0x4, offset = 0x4, fixed_abs, tag = 'smem constant byte address 0x4 - core index']
  #allocation1 [shape = 'u32[144,128]{1,0:T(1,128)}', space=vmem, size = 0x12000, scoped, tag = 'internal scratch']
  %s0 = inlined_call_operand.vmem [shape: f32[5,8], index: 0, kind: input, shape index: {}]
  %s1 = inlined_call_operand.vmem [shape: f32[16,6], index: 1, kind: input, shape index: {}]
  %s2 = inlined_call_operand.vmem [shape: f32[1,17], index: 2, kind: input, shape index: {}]
  %s3 = inlined_call_operand.hbm [shape: f32[1,8], index: 3, kind: output, shape index: {}]
  %s4 = sld [smem:[#allocation0]]
  $region22: #{tpu_custom_call.1} parent=0
    _
  %s6 = ssub.s32 1, %s4
  %s7 = scalar_select 0, %s6, %s4
  $region1: #{tpu_custom_call.1} parent=0
    #allocation2 [shape = 'u8[512]{0}', space=vmem, size = 0x400, scoped, tag = 'output window, operand 0, single buffered']
    #allocation3 [shape = 's32[1]{0}', space=sflag, size = 0x4, scoped, tag = 'scoped memory for tpu_custom_call.1']
    %8 = vsyncpa [#allocation3], 0
    // Predicated region
    $region2: #{tpu_custom_call.1} parent=1 // pred_check
      _
    $region3: #{tpu_custom_call.1} parent=1 // pred_check_branch
      %10 = sbr.rel (0) target = $region5
    $region4: #{tpu_custom_call.1} parent=1 // pred_region
      _
    $region5: #{tpu_custom_call.1} parent=1 // pred_fallthru
      _
    // Predicated region
    $region6: #{tpu_custom_call.1} parent=1 // pred_check
      _
    $region7: #{tpu_custom_call.1} parent=1 // pred_check_branch
      %12 = sbr.rel (0) target = $region9
    $region8: #{tpu_custom_call.1} parent=1 // pred_region
      _
    $region9: #{tpu_custom_call.1} parent=1 // pred_fallthru
      _
    // Predicated region
    $region10: #{tpu_custom_call.1} parent=1 // pred_check
      _
    $region11: #{tpu_custom_call.1} parent=1 // pred_check_branch
      %14 = sbr.rel (0) target = $region13
    $region12: #{tpu_custom_call.1} parent=1 // pred_region
      _
    $region13: #{tpu_custom_call.1} parent=1 // pred_fallthru
      _
    %v15 = vld [vmem:[%s0] sm:$0x1f]
    %v16 = vld [vmem:[%s1] sm:$0xff]
    %v17 = vld [vmem:[%s1 + $0x8] sm:$0xff]
    %v18 = vld [vmem:[%s2] sm:$0x1]
    %20 = vset.pattern.permute.xlu0 5
    %21 = vperm.xlu0 %20, %v16
    %v22 = vpop.permute.xlu0 %21
    %25 = vset.pattern.permute.xlu0 5
    %26 = vperm.xlu0 %25, %v17
    %v27 = vpop.permute.xlu0 %26
    %vm29 = vcmask 39936
    %v30 = vsel %vm29, %v16, 0
    %v32 = vsel %vm29, %v17, 0
    %vm34 = vcmask 1044480
    %v36 = vsel %vm34, %v15, 0
    %38 = vmatprep.subr.mxu0 0.0
    %39 = vmatpush1.msra.mxu0 %v36
    %40 = vmatprep.subr.mxu0 0.0
    %41 = vmatpush1.msra.mxu0 0.0
    %42 = vmatprep.subr.mxu0 0.0
    %43 = vmatpush1.msra.mxu0 0.0
    %44 = vmatprep.subr.mxu0 0.0
    %45 = vmatpush1.msra.mxu0 0.0
    %46 = vmatprep.subr.mxu0 0.0
    %47 = vmatpush1.msra.mxu0 0.0
    %48 = vmatprep.subr.mxu0 0.0
    %49 = vmatpush1.msra.mxu0 0.0
    %50 = vmatprep.subr.mxu0 0.0
    %51 = vmatpush1.msra.mxu0 0.0
    %52 = vmatprep.subr.mxu0 0.0
    %53 = vmatpush1.msra.mxu0 0.0
    %54 = vmatprep.subr.mxu0 0.0
    %55 = vmatpush1.msra.mxu0 0.0
    %56 = vmatprep.subr.mxu0 0.0
    %57 = vmatpush1.msra.mxu0 0.0
    %58 = vmatprep.subr.mxu0 0.0
    %59 = vmatpush1.msra.mxu0 0.0
    %60 = vmatprep.subr.mxu0 0.0
    %61 = vmatpush1.msra.mxu0 0.0
    %62 = vmatprep.subr.mxu0 0.0
    %63 = vmatpush1.msra.mxu0 0.0
    %64 = vmatprep.subr.mxu0 0.0
    %65 = vmatpush1.msra.mxu0 0.0
    %66 = vmatprep.subr.mxu0 0.0
    %67 = vmatpush1.msra.mxu0 0.0
    %68 = vmatprep.subr.mxu0 0.0
    %69 = vmatpush1.msra.mxu0 0.0
    %70 = vmatprep.subr.mxu0 0.0
    %71 = vmatpush1.msra.mxu0 0.0
    %72 = vmatprep.subr.mxu0 0.0
    %73 = vmatpush1.msra.mxu0 0.0
    %74 = vmatprep.subr.mxu0 0.0
    %75 = vmatpush1.msra.mxu0 0.0
    %76 = vmatprep.subr.mxu0 0.0
    %77 = vmatpush1.msra.mxu0 0.0
    %78 = vmatprep.subr.mxu0 0.0
    %79 = vmatpush1.msra.mxu0 0.0
    %80 = vmatprep.subr.mxu0 0.0
    %81 = vmatpush1.msra.mxu0 0.0
    %82 = vmatprep.subr.mxu0 0.0
    %83 = vmatpush1.msra.mxu0 0.0
    %84 = vmatprep.subr.mxu0 0.0
    %85 = vmatpush1.msra.mxu0 0.0
    %86 = vmatprep.subr.mxu0 0.0
    %87 = vmatpush1.msra.mxu0 0.0
    %88 = vmatprep.subr.mxu0 0.0
    %89 = vmatpush1.msra.mxu0 0.0
    %90 = vmatprep.subr.mxu0 0.0
    %91 = vmatpush1.msra.mxu0 0.0
    %92 = vmatprep.subr.mxu0 0.0
    %93 = vmatpush1.msra.mxu0 0.0
    %94 = vmatprep.subr.mxu0 0.0
    %95 = vmatpush1.msra.mxu0 0.0
    %96 = vmatprep.subr.mxu0 0.0
    %97 = vmatpush1.msra.mxu0 0.0
    %98 = vmatprep.subr.mxu0 0.0
    %99 = vmatpush1.msra.mxu0 0.0
    %100 = vmatprep.subr.mxu0 0.0
    %101 = vmatpush1.msra.mxu0 0.0
    %102 = vmatprep.mubr.f32.mxu0 0.0
    %103 = vmatmul.mubr.f32.gmra.mrb[0].mxu0 %v30
    %v104 = vpop.f32.mrb[0].mxu0
    %v105 = vadd.f32 %v22, %v104
    %v106 = vpop.f32.mrb[0].mxu0
    %107 = vmatprep.mubr.f32.mxu0 0.0
    %108 = vmatmul.mubr.f32.gmra.mrb[0].mxu0 %v32
    %v109 = vpop.f32.mrb[0].mxu0
    %v110 = vadd.f32 %v27, %v109
    %v111 = vpop.f32.mrb[0].mxu0
    %112 = vdwg.mxu0
    %v113 = vmax.f32 %v105, 0.0
    %v114 = vmax.f32 %v110, 0.0
    %116 = vset.pattern.permute.xlu0 16
    %117 = vperm.xlu0 %116, %v18
    %v118 = vpop.permute.xlu0 %117
    %v120 = vlaneseq
    %v121 = vshrl.u32 %v120, 7
    %v122 = vsub.s32 0, %v121
    %v123 = vrot.slane %v118, %v122
    %vm124 = vcmask 130048
    %v125 = vsel %vm124, %v18, 0
    %127 = vmatprep.subr.mxu0 0.0
    %128 = vmatpush1.msra.mxu0 %v113
    %129 = vmatprep.subr.mxu0 0.0
    %130 = vmatpush1.msra.mxu0 %v114
    %131 = vmatprep.subr.mxu0 0.0
    %132 = vmatpush1.msra.mxu0 0.0
    %133 = vmatprep.subr.mxu0 0.0
    %134 = vmatpush1.msra.mxu0 0.0
    %135 = vmatprep.subr.mxu0 0.0
    %136 = vmatpush1.msra.mxu0 0.0
    %137 = vmatprep.subr.mxu0 0.0
    %138 = vmatpush1.msra.mxu0 0.0
    %139 = vmatprep.subr.mxu0 0.0
    %140 = vmatpush1.msra.mxu0 0.0
    %141 = vmatprep.subr.mxu0 0.0
    %142 = vmatpush1.msra.mxu0 0.0
    %143 = vmatprep.subr.mxu0 0.0
    %144 = vmatpush1.msra.mxu0 0.0
    %145 = vmatprep.subr.mxu0 0.0
    %146 = vmatpush1.msra.mxu0 0.0
    %147 = vmatprep.subr.mxu0 0.0
    %148 = vmatpush1.msra.mxu0 0.0
    %149 = vmatprep.subr.mxu0 0.0
    %150 = vmatpush1.msra.mxu0 0.0
    %151 = vmatprep.subr.mxu0 0.0
    %152 = vmatpush1.msra.mxu0 0.0
    %153 = vmatprep.subr.mxu0 0.0
    %154 = vmatpush1.msra.mxu0 0.0
    %155 = vmatprep.subr.mxu0 0.0
    %156 = vmatpush1.msra.mxu0 0.0
    %157 = vmatprep.subr.mxu0 0.0
    %158 = vmatpush1.msra.mxu0 0.0
    %159 = vmatprep.subr.mxu0 0.0
    %160 = vmatpush1.msra.mxu0 0.0
    %161 = vmatprep.subr.mxu0 0.0
    %162 = vmatpush1.msra.mxu0 0.0
    %163 = vmatprep.subr.mxu0 0.0
    %164 = vmatpush1.msra.mxu0 0.0
    %165 = vmatprep.subr.mxu0 0.0
    %166 = vmatpush1.msra.mxu0 0.0
    %167 = vmatprep.subr.mxu0 0.0
    %168 = vmatpush1.msra.mxu0 0.0
    %169 = vmatprep.subr.mxu0 0.0
    %170 = vmatpush1.msra.mxu0 0.0
    %171 = vmatprep.subr.mxu0 0.0
    %172 = vmatpush1.msra.mxu0 0.0
    %173 = vmatprep.subr.mxu0 0.0
    %174 = vmatpush1.msra.mxu0 0.0
    %175 = vmatprep.subr.mxu0 0.0
    %176 = vmatpush1.msra.mxu0 0.0
    %177 = vmatprep.subr.mxu0 0.0
    %178 = vmatpush1.msra.mxu0 0.0
    %179 = vmatprep.subr.mxu0 0.0
    %180 = vmatpush1.msra.mxu0 0.0
    %181 = vmatprep.subr.mxu0 0.0
    %182 = vmatpush1.msra.mxu0 0.0
    %183 = vmatprep.subr.mxu0 0.0
    %184 = vmatpush1.msra.mxu0 0.0
    %185 = vmatprep.subr.mxu0 0.0
    %186 = vmatpush1.msra.mxu0 0.0
    %187 = vmatprep.subr.mxu0 0.0
    %188 = vmatpush1.msra.mxu0 0.0
    %189 = vmatprep.subr.mxu0 0.0
    %190 = vmatpush1.msra.mxu0 0.0
    %191 = vmatprep.mubr.f32.mxu0 0.0
    %192 = vmatmul.mubr.f32.gmra.mrb[0].mxu0 %v125
    %v193 = vpop.f32.mrb[0].mxu0
    %v194 = vadd.f32 %v123, %v193
    %v195 = vpop.f32.mrb[0].mxu0
    %196 = vdwg.mxu0
    %v197 = vmul.f32 %v194, 0.5
    %v198 = vtanh.pop %v197
    %v199 = vadd.f32 %v198, 1.0
    %v200 = vmul.f32 %v199, 0.5
    %vm201 = vcmask 57344
    %202 = vst.msk [vmem:[#allocation2] sm:$0x1] %vm201, %v200
    // Predicated region
    $region14: #{tpu_custom_call.1} parent=1 // pred_check
      _
    $region15: #{tpu_custom_call.1} parent=1 // pred_check_branch
      %204 = sbr.rel (0) target = $region17
    $region16: #{tpu_custom_call.1} parent=1 // pred_region
      %s206 = ssub.s32 16, 16
      %207 = vsyncadd [#allocation3], %s206
      %s209 = sshll.u32 [#allocation2], 4
      %s210 = int_to_ptr.vmem [resolvable:$true] %s209
      %212 = dma.vmem_to_hbm [thread:$0]  %s210, 16, %s3, [#allocation3]
    $region17: #{tpu_custom_call.1} parent=1 // pred_fallthru
      _
    // Predicated region
    $region18: #{tpu_custom_call.1} parent=1 // pred_check
      _
    $region19: #{tpu_custom_call.1} parent=1 // pred_check_branch
      %214 = sbr.rel (0) target = $region21
    $region20: #{tpu_custom_call.1} parent=1 // pred_region
      %215 = dma.done [#allocation3], 16
    $region21: #{tpu_custom_call.1} parent=1 // pred_fallthru
      _
    %216 = vsyncpa [#allocation3], 1

</llo_original>
